<compile_context>
chip_gen: v7x
topology: tpu7x:2x2x1
jax: 0.10.0
libtpu: 0.0.40
codegen_flags: <defaults>
</compile_context>

<pallas_src>
import jax
import jax.numpy as jnp
from jax.experimental import pallas as pl
from jax.experimental.pallas import tpu as pltpu

_BN_EPS = 1e-5


def conve_kernel(patches_ref, wconv_ref, cbias_ref, wfc_ref, fcb_ref, out_ref):
    """One batch tile of the fused ConvE forward (eval mode, BN folded).

    patches_ref : [P, TB, K2p] bf16  im2col patches of the stacked image
    wconv_ref   : [K2p, Fp]    bf16  conv weight with bn0/bn1 folded in
    cbias_ref   : [1, Fp]      f32   conv bias with bn0/bn1 folded in
    wfc_ref     : [P, Fp, Ep]  bf16  fc weight (torch (f,p) order) w/ bn2 folded
    fcb_ref     : [1, Ep]      f32   fc bias with bn2 folded in
    out_ref     : [TB, Ep]     f32
    """
    n_pos = patches_ref.shape[0]
    wconv = wconv_ref[...]            # loop-invariant, keep in vregs
    cbias = cbias_ref[...]
    out_ref[...] = jnp.zeros_like(out_ref)

    @pl.loop(0, n_pos)
    def _(p):
        # conv at output position p: [TB, K2p] @ [K2p, Fp], f32 accumulate
        h = jnp.dot(patches_ref[p], wconv, preferred_element_type=jnp.float32)
        h = jnp.maximum(h + cbias, 0.0)                     # bn1 folded + relu
        # fc contribution of position p: [TB, Fp] @ [Fp, Ep]
        out_ref[...] += jnp.dot(h.astype(wfc_ref.dtype), wfc_ref[p],
                                preferred_element_type=jnp.float32)

    out_ref[...] = jnp.maximum(out_ref[...] + fcb_ref[...], 0.0)  # bn2 + relu


def _round_up(x, m):
    return (x + m - 1) // m * m


def conve_forward(head_emb, rel_emb, params, cfg, block_b=None):
    """head_emb, rel_emb: [B, embed_dim] f32.  Returns [B, embed_dim] f32."""
    B, D = head_emb.shape
    k_w, k_h, ks = cfg["k_w"], cfg["k_h"], cfg["ker_sz"]
    F, E = cfg["num_filt"], cfg["embed_dim"]
    assert D == E == k_w * k_h

    OH = 2 * k_w - ks + 1          # flat_sz_h
    OW = k_h - ks + 1              # flat_sz_w
    P = OH * OW                    # conv output positions
    K2 = ks * ks

    LANE = 128
    K2p = _round_up(K2, LANE)
    Fp = _round_up(F, LANE)
    Ep = _round_up(E, LANE)

    # ---- batch tiling: multiple-of-8 tiles, >=2 tiles when possible ---------
    if block_b is None:
        block_b = min(256, _round_up(max(B // 2, 8), 8))
    block_b = max(8, _round_up(block_b, 8))
    Bp = _round_up(B, block_b)
    if Bp != B:
        pad = Bp - B
        head_emb = jnp.pad(head_emb, ((0, pad), (0, 0)))
        rel_emb = jnp.pad(rel_emb, ((0, pad), (0, 0)))
    nb = Bp // block_b

    # ---- layout plumbing: ConvE interleave + im2col (wrapper-side) ----------
    img = jnp.stack([head_emb, rel_emb], axis=2).reshape(Bp, 2 * k_w, k_h)
    cols = []
    for i in range(ks):
        for j in range(ks):
            cols.append(img[:, i:i + OH, j:j + OW])
    patches = jnp.stack(cols, axis=-1).reshape(Bp, P, K2)    # p-major, k-minor
    patches = jnp.transpose(patches, (1, 0, 2))              # [P, Bp, K2]
    patches = jnp.pad(patches, ((0, 0), (0, 0), (0, K2p - K2)))
    patches = patches.astype(jnp.bfloat16)

    # ---- fold BatchNorms (running stats) into conv / fc weights -------------
    s0 = params["bn0_gamma"] * jax.lax.rsqrt(params["bn0_var"] + _BN_EPS)
    t0 = params["bn0_beta"] - params["bn0_mean"] * s0
    s1 = params["bn1_gamma"] * jax.lax.rsqrt(params["bn1_var"] + _BN_EPS)
    t1 = params["bn1_beta"] - params["bn1_mean"] * s1
    s2 = params["bn2_gamma"] * jax.lax.rsqrt(params["bn2_var"] + _BN_EPS)
    t2 = params["bn2_beta"] - params["bn2_mean"] * s2

    w = params["conv_w"].reshape(F, K2)                       # [F, K2]
    conv_b = params["conv_b"] if cfg["bias"] else jnp.zeros((F,), jnp.float32)
    wconv = (w * (s0 * s1)[:, None]).T                        # [K2, F]
    cbias = s1 * (conv_b + t0 * jnp.sum(w, axis=1)) + t1      # [F]
    wconv = jnp.pad(wconv, ((0, K2p - K2), (0, Fp - F))).astype(jnp.bfloat16)
    cbias = jnp.pad(cbias, (0, Fp - F)).reshape(1, Fp).astype(jnp.float32)

    # torch flattens the conv output as (filter, oh, ow) -> fc column f*P + p.
    wfc = params["fc_w"].reshape(E, F, P).transpose(2, 1, 0)  # [P, F, E]
    wfc = wfc * s2[None, None, :]
    fcb = s2 * params["fc_b"] + t2
    wfc = jnp.pad(wfc, ((0, 0), (0, Fp - F), (0, Ep - E))).astype(jnp.bfloat16)
    fcb = jnp.pad(fcb, (0, Ep - E)).reshape(1, Ep).astype(jnp.float32)

    # ---- VMEM budget / cost estimate ----------------------------------------
    vmem_need = (2 * P * block_b * K2p * 2        # patches (double-buffered)
                 + 2 * K2p * Fp * 2               # conv weight
                 + 2 * P * Fp * Ep * 2            # fc weight
                 + 2 * 8 * (Fp + Ep) * 4          # biases (sublane-padded)
                 + 2 * block_b * Ep * 4)          # output
    vmem_limit = int(min(max(2 * vmem_need, 32 << 20), 48 << 20))

    cost = pl.CostEstimate(
        flops=2 * Bp * P * K2 * F + 2 * Bp * P * F * E,
        transcendentals=0,
        bytes_accessed=(2 * (Bp * P * K2p + K2p * Fp + P * Fp * Ep)
                        + 4 * (Fp + Ep + Bp * Ep)),
    )

    out = pl.pallas_call(
        conve_kernel,
        out_shape=jax.ShapeDtypeStruct((Bp, Ep), jnp.float32),
        grid_spec=pltpu.PrefetchScalarGridSpec(
            num_scalar_prefetch=0,
            grid=(nb,),
            in_specs=[
                pl.BlockSpec((P, block_b, K2p), lambda i: (0, i, 0)),  # patches
                pl.BlockSpec((K2p, Fp), lambda i: (0, 0)),             # conv w
                pl.BlockSpec((1, Fp), lambda i: (0, 0)),               # conv b
                pl.BlockSpec((P, Fp, Ep), lambda i: (0, 0, 0)),        # fc w
                pl.BlockSpec((1, Ep), lambda i: (0, 0)),               # fc b
            ],
            out_specs=pl.BlockSpec((block_b, Ep), lambda i: (i, 0)),
        ),
        compiler_params=pltpu.CompilerParams(
            dimension_semantics=("parallel",),
            vmem_limit_bytes=vmem_limit),
        cost_estimate=cost,
    )(patches, wconv, cbias, wfc, fcb)

    return out[:B, :E]


def conve_reference(head_emb, rel_emb, params, cfg):
    """Pure-JAX eval-mode ConvE forward mirroring the PyTorch module."""
    B, _ = head_emb.shape
    k_w, k_h, ks = cfg["k_w"], cfg["k_h"], cfg["ker_sz"]
    F = cfg["num_filt"]
    hp = jax.lax.Precision.HIGHEST

    img = jnp.stack([head_emb, rel_emb], axis=2).reshape(B, 1, 2 * k_w, k_h)
    x = ((img - params["bn0_mean"]) / jnp.sqrt(params["bn0_var"] + _BN_EPS)
         * params["bn0_gamma"] + params["bn0_beta"])
    x = jax.lax.conv_general_dilated(
        x, params["conv_w"], window_strides=(1, 1), padding="VALID",
        dimension_numbers=("NCHW", "OIHW", "NCHW"), precision=hp)
    if cfg["bias"]:
        x = x + params["conv_b"].reshape(1, F, 1, 1)
    x = ((x - params["bn1_mean"].reshape(1, F, 1, 1))
         / jnp.sqrt(params["bn1_var"].reshape(1, F, 1, 1) + _BN_EPS)
         * params["bn1_gamma"].reshape(1, F, 1, 1)
         + params["bn1_beta"].reshape(1, F, 1, 1))
    x = jnp.maximum(x, 0.0)
    x = x.reshape(B, -1)
    x = jnp.dot(x, params["fc_w"].T, precision=hp) + params["fc_b"]
    x = ((x - params["bn2_mean"]) / jnp.sqrt(params["bn2_var"] + _BN_EPS)
         * params["bn2_gamma"] + params["bn2_beta"])
    return jnp.maximum(x, 0.0)


if __name__ == "__main__":
    # Small ConvE config: embed_dim = k_w * k_h, VALID 3x3 conv, 4 filters.
    cfg = dict(embed_dim=32, k_w=4, k_h=8, ker_sz=3, num_filt=4, bias=True,
               n_ent=10, hid_drop=0.3, hid_drop2=0.3, feat_drop=0.3)
    B = 16
    D, F, ks = cfg["embed_dim"], cfg["num_filt"], cfg["ker_sz"]
    OH = 2 * cfg["k_w"] - ks + 1
    OW = cfg["k_h"] - ks + 1
    flat_sz = OH * OW * F                                  # 6*6*4 = 144

    keys = jax.random.split(jax.random.PRNGKey(0), 18)
    head = jax.random.normal(keys[0], (B, D), jnp.float32)
    rel = jax.random.normal(keys[1], (B, D), jnp.float32)

    cb = 1.0 / (ks * ks) ** 0.5
    fb = 1.0 / flat_sz ** 0.5
    params = dict(
        conv_w=jax.random.uniform(keys[2], (F, 1, ks, ks), jnp.float32, -cb, cb),
        conv_b=jax.random.uniform(keys[3], (F,), jnp.float32, -cb, cb),
        fc_w=jax.random.uniform(keys[4], (D, flat_sz), jnp.float32, -fb, fb),
        fc_b=jax.random.uniform(keys[5], (D,), jnp.float32, -fb, fb),
        bn0_mean=0.1 * jax.random.normal(keys[6], (), jnp.float32),
        bn0_var=jax.random.uniform(keys[7], (), jnp.float32, 0.8, 1.2),
        bn0_gamma=jax.random.uniform(keys[8], (), jnp.float32, 0.9, 1.1),
        bn0_beta=0.1 * jax.random.normal(keys[9], (), jnp.float32),
        bn1_mean=0.1 * jax.random.normal(keys[10], (F,), jnp.float32),
        bn1_var=jax.random.uniform(keys[11], (F,), jnp.float32, 0.8, 1.2),
        bn1_gamma=jax.random.uniform(keys[12], (F,), jnp.float32, 0.9, 1.1),
        bn1_beta=0.1 * jax.random.normal(keys[13], (F,), jnp.float32),
        bn2_mean=0.1 * jax.random.normal(keys[14], (D,), jnp.float32),
        bn2_var=jax.random.uniform(keys[15], (D,), jnp.float32, 0.8, 1.2),
        bn2_gamma=jax.random.uniform(keys[16], (D,), jnp.float32, 0.9, 1.1),
        bn2_beta=0.1 * jax.random.normal(keys[17], (D,), jnp.float32),
    )
    # self.bias (n_ent entity bias) is only used by get_logits/score_fn,
    # never by forward(); kept for completeness.
    ent_bias = jnp.zeros((cfg["n_ent"],), jnp.float32)  # noqa: F841

    # Default block_b heuristic gives block_b=8 -> grid=(2,), exercising the
    # batch pipeline / parallel axis.
    out = conve_forward(head, rel, params, cfg)
    jax.block_until_ready(out)

    ref = conve_reference(head, rel, params, cfg)
    assert out.shape == (B, D)
    # Tolerance reflects explicit bf16 storage of patches/weights (f32 accum);
    # the reference runs at Precision.HIGHEST.
    max_err = float(jnp.max(jnp.abs(out - ref)))
    assert jnp.allclose(out, ref, atol=5e-2, rtol=5e-2), max_err

    print("KERNEL_OK")
</pallas_src>

<mosaic_0001>
module attributes {stable_mosaic.version = 11 : i64} {
  func.func @conve_kernel(%arg0: i32, %arg1: memref<36x8x128xbf16, #tpu.memory_space<vmem>>, %arg2: memref<128x128xbf16, #tpu.memory_space<vmem>>, %arg3: memref<1x128xf32, #tpu.memory_space<vmem>>, %arg4: memref<36x128x128xbf16, #tpu.memory_space<vmem>>, %arg5: memref<1x128xf32, #tpu.memory_space<vmem>>, %arg6: memref<8x128xf32, #tpu.memory_space<vmem>>) attributes {dimension_semantics = [#tpu.dimension_semantics<parallel>], iteration_bounds = array<i64: 2>, scalar_prefetch = 0 : i64, scratch_operands = 0 : i64, tpu.core_type = #tpu.core_type<tc>, window_params = [{transform_indices = @transform_0, window_bounds = array<i64: 36, 8, 128>}, {pipeline_mode = #tpu.pipeline_mode<synchronous>, transform_indices = @transform_1, window_bounds = array<i64: 128, 128>}, {pipeline_mode = #tpu.pipeline_mode<synchronous>, transform_indices = @transform_2, window_bounds = array<i64: 1, 128>}, {pipeline_mode = #tpu.pipeline_mode<synchronous>, transform_indices = @transform_3, window_bounds = array<i64: 36, 128, 128>}, {pipeline_mode = #tpu.pipeline_mode<synchronous>, transform_indices = @transform_4, window_bounds = array<i64: 1, 128>}, {transform_indices = @transform_5, window_bounds = array<i64: 8, 128>}]} {
    %c0 = arith.constant 0 : index
    %c0_0 = arith.constant 0 : index
    %0 = vector.load %arg2[%c0, %c0_0] : memref<128x128xbf16, #tpu.memory_space<vmem>>, vector<128x128xbf16>
    %c0_1 = arith.constant 0 : index
    %c0_2 = arith.constant 0 : index
    %1 = vector.load %arg3[%c0_1, %c0_2] : memref<1x128xf32, #tpu.memory_space<vmem>>, vector<1x128xf32>
    %cst = arith.constant 0.000000e+00 : f32
    %2 = vector.broadcast %cst : f32 to vector<8x128xf32>
    %c0_3 = arith.constant 0 : index
    %c0_4 = arith.constant 0 : index
    %3 = vector.load %arg6[%c0_3, %c0_4] : memref<8x128xf32, #tpu.memory_space<vmem>>, vector<8x128xf32>
    tpu.vector_store %arg6[%c0_3, %c0_4], %2 {strides = array<i32>} : memref<8x128xf32, #tpu.memory_space<vmem>>, vector<8x128xf32>,
    %c0_i32 = arith.constant 0 : i32
    %c36_i32 = arith.constant 36 : i32
    %4 = arith.addi %c0_i32, %c36_i32 : i32
    %c1_i32 = arith.constant 1 : i32
    scf.for %arg7 = %c0_i32 to %4 step %c1_i32  : i32 {
      %c1_i32_13 = arith.constant 1 : i32
      %12 = arith.muli %arg7, %c1_i32_13 : i32
      %c0_i32_14 = arith.constant 0 : i32
      %13 = arith.addi %c0_i32_14, %12 : i32
      %14 = arith.index_cast %13 : i32 to index
      %c0_15 = arith.constant 0 : index
      %c0_16 = arith.constant 0 : index
      %15 = vector.load %arg1[%14, %c0_15, %c0_16] : memref<36x8x128xbf16, #tpu.memory_space<vmem>>, vector<1x8x128xbf16>
      %16 = vector.shape_cast %15 : vector<1x8x128xbf16> to vector<8x128xbf16>
      %cst_17 = arith.constant dense<0.000000e+00> : vector<8x128xf32>
      %17 = tpu.matmul %16, %0, %cst_17 {dimension_numbers = #tpu.dot_dimension_numbers<[1], [0], [0], [1], [0, 0, 1, 1], [], []>} : vector<8x128xbf16>, vector<128x128xbf16>, vector<8x128xf32> -> vector<8x128xf32>
      %18 = vector.broadcast %1 : vector<1x128xf32> to vector<8x128xf32>
      %19 = arith.addf %17, %18 : vector<8x128xf32>
      %cst_18 = arith.constant 0.000000e+00 : f32
      %20 = vector.broadcast %cst_18 : f32 to vector<8x128xf32>
      %21 = arith.maximumf %19, %20 : vector<8x128xf32>
      %c0_19 = arith.constant 0 : index
      %c0_20 = arith.constant 0 : index
      %22 = vector.load %arg6[%c0_19, %c0_20] : memref<8x128xf32, #tpu.memory_space<vmem>>, vector<8x128xf32>
      %23 = arith.truncf %21 : vector<8x128xf32> to vector<8x128xbf16>
      %24 = arith.index_cast %13 : i32 to index
      %c0_21 = arith.constant 0 : index
      %c0_22 = arith.constant 0 : index
      %25 = vector.load %arg4[%24, %c0_21, %c0_22] : memref<36x128x128xbf16, #tpu.memory_space<vmem>>, vector<1x128x128xbf16>
      %26 = vector.shape_cast %25 : vector<1x128x128xbf16> to vector<128x128xbf16>
      %cst_23 = arith.constant dense<0.000000e+00> : vector<8x128xf32>
      %27 = tpu.matmul %23, %26, %cst_23 {dimension_numbers = #tpu.dot_dimension_numbers<[1], [0], [0], [1], [0, 0, 1, 1], [], []>} : vector<8x128xbf16>, vector<128x128xbf16>, vector<8x128xf32> -> vector<8x128xf32>
      %28 = arith.addf %22, %27 : vector<8x128xf32>
      %c0_24 = arith.constant 0 : index
      %c0_25 = arith.constant 0 : index
      %29 = vector.load %arg6[%c0_24, %c0_25] : memref<8x128xf32, #tpu.memory_space<vmem>>, vector<8x128xf32>
      tpu.vector_store %arg6[%c0_24, %c0_25], %28 {strides = array<i32>} : memref<8x128xf32, #tpu.memory_space<vmem>>, vector<8x128xf32>,
    }
    %c36_i32_5 = arith.constant 36 : i32
    %c0_6 = arith.constant 0 : index
    %c0_7 = arith.constant 0 : index
    %5 = vector.load %arg6[%c0_6, %c0_7] : memref<8x128xf32, #tpu.memory_space<vmem>>, vector<8x128xf32>
    %c0_8 = arith.constant 0 : index
    %c0_9 = arith.constant 0 : index
    %6 = vector.load %arg5[%c0_8, %c0_9] : memref<1x128xf32, #tpu.memory_space<vmem>>, vector<1x128xf32>
    %7 = vector.broadcast %6 : vector<1x128xf32> to vector<8x128xf32>
    %8 = arith.addf %5, %7 : vector<8x128xf32>
    %cst_10 = arith.constant 0.000000e+00 : f32
    %9 = vector.broadcast %cst_10 : f32 to vector<8x128xf32>
    %10 = arith.maximumf %8, %9 : vector<8x128xf32>
    %c0_11 = arith.constant 0 : index
    %c0_12 = arith.constant 0 : index
    %11 = vector.load %arg6[%c0_11, %c0_12] : memref<8x128xf32, #tpu.memory_space<vmem>>, vector<8x128xf32>
    tpu.vector_store %arg6[%c0_11, %c0_12], %10 {strides = array<i32>} : memref<8x128xf32, #tpu.memory_space<vmem>>, vector<8x128xf32>,
    return
  }
  func.func @transform_0(%arg0: i32) -> (i32, i32, i32) {
    %c0_i32 = arith.constant 0 : i32
    %c0_i32_0 = arith.constant 0 : i32
    %c0_i32_1 = arith.constant 0 : i32
    return %c0_i32, %arg0, %c0_i32_0 : i32, i32, i32
  }
  func.func @transform_1(%arg0: i32) -> (i32, i32) {
    %c0_i32 = arith.constant 0 : i32
    %c0_i32_0 = arith.constant 0 : i32
    %c0_i32_1 = arith.constant 0 : i32
    return %c0_i32, %c0_i32_0 : i32, i32
  }
  func.func @transform_2(%arg0: i32) -> (i32, i32) {
    %c0_i32 = arith.constant 0 : i32
    %c0_i32_0 = arith.constant 0 : i32
    %c0_i32_1 = arith.constant 0 : i32
    return %c0_i32, %c0_i32_0 : i32, i32
  }
  func.func @transform_3(%arg0: i32) -> (i32, i32, i32) {
    %c0_i32 = arith.constant 0 : i32
    %c0_i32_0 = arith.constant 0 : i32
    %c0_i32_1 = arith.constant 0 : i32
    %c0_i32_2 = arith.constant 0 : i32
    return %c0_i32, %c0_i32_0, %c0_i32_1 : i32, i32, i32
  }
  func.func @transform_4(%arg0: i32) -> (i32, i32) {
    %c0_i32 = arith.constant 0 : i32
    %c0_i32_0 = arith.constant 0 : i32
    %c0_i32_1 = arith.constant 0 : i32
    return %c0_i32, %c0_i32_0 : i32, i32
  }
  func.func @transform_5(%arg0: i32) -> (i32, i32) {
    %c0_i32 = arith.constant 0 : i32
    %c0_i32_0 = arith.constant 0 : i32
    return %arg0, %c0_i32 : i32, i32
  }
}

</mosaic_0001>

<llo_original>
// kernel: tpu_custom_call.1
$region0: #{tpu_custom_call.1}
  #allocation0 [shape = 'u32[]', space=smem, size = 0x4, offset = 0x4, fixed_abs, tag = 'smem constant byte address 0x4 - core index']
  #allocation1 [shape = 'u32[144,128]{1,0:T(1,128)}', space=vmem, size = 0x12000, scoped, tag = 'internal scratch']
  %s0 = inlined_call_operand.hbm [shape: bf16[36,16,128], index: 0, kind: input, shape index: {}]
  %s1 = inlined_call_operand.hbm [shape: bf16[128,128], index: 1, kind: input, shape index: {}]
  %s2 = inlined_call_operand.hbm [shape: f32[1,128], index: 2, kind: input, shape index: {}]
  %s3 = inlined_call_operand.hbm [shape: bf16[36,128,128], index: 3, kind: input, shape index: {}]
  %s4 = inlined_call_operand.hbm [shape: f32[1,128], index: 4, kind: input, shape index: {}]
  %s5 = inlined_call_operand.hbm [shape: f32[16,128], index: 5, kind: output, shape index: {}]
  %s6 = sld [smem:[#allocation0]]
  $region80: #{tpu_custom_call.1} parent=0
    _
  %s8 = ssub.s32 1, %s6
  %s9 = scalar_select 0, %s8, %s6
  $region1: #{tpu_custom_call.1} parent=0
    #allocation2 [shape = 'u8[147456]{0}', space=vmem, size = 0x24000, scoped, tag = 'input window, operand 0']
    #allocation3 [shape = 's32[2]{0}', space=sflag, size = 0x8, scoped, tag = 'scoped memory for tpu_custom_call.1']
    #allocation4 [shape = 's32[2]{0}', space=sflag, size = 0x8, scoped, tag = 'scoped memory for tpu_custom_call.1']
    #allocation5 [shape = 'u8[32768]{0}', space=vmem, size = 0x8000, scoped, tag = 'input window, operand 1, single buffered']
    #allocation6 [shape = 's32[1]{0}', space=sflag, size = 0x4, scoped, tag = 'scoped memory for tpu_custom_call.1']
    #allocation7 [shape = 'u8[512]{0}', space=vmem, size = 0x400, scoped, tag = 'input window, operand 2, single buffered']
    #allocation8 [shape = 'u8[1179648]{0}', space=vmem, size = 0x120000, scoped, tag = 'input window, operand 3, single buffered']
    #allocation9 [shape = 's32[1]{0}', space=sflag, size = 0x4, scoped, tag = 'scoped memory for tpu_custom_call.1']
    #allocation10 [shape = 'u8[512]{0}', space=vmem, size = 0x400, scoped, tag = 'input window, operand 4, single buffered']
    #allocation11 [shape = 'u8[8192]{0}', space=vmem, size = 0x2000, scoped, tag = 'output window, operand 0']
    %10 = vsyncpa [#allocation3], 0
    %s11 = scalar_lea.sflag [#allocation3], 1
    %12 = vsyncpa %s11, 0
    %13 = vsyncpa [#allocation6], 0
    %14 = vsyncpa [#allocation9], 0
    %15 = vsyncpa [#allocation4], 0
    %s16 = scalar_lea.sflag [#allocation4], 1
    %17 = vsyncpa %s16, 0
    loop: start=0, step=1, limit=4
    $region2: #{tpu_custom_call.1} parent=1 // loop_pre_header
      _
    $region3: #{tpu_custom_call.1} parent=1 // loop_header
      %s19 = sphi 0, %s23
      %p20 = scmp.ge.s32.totalorder %s19, 4
      %s29 = sphi 0, %s31
      %s32 = sphi 0, %s29
      %s33 = sphi 0, %s32
      %s49 = sphi 0, %s33
      %s53 = sphi 0, %s53
      %s55 = sphi 0, %s53
      %s56 = sphi 0, %s55
      %s70 = sphi 0, %s56
      %s74 = sphi 0, %s74
      %s76 = sphi 0, %s74
      %s77 = sphi 0, %s76
      %s91 = sphi 0, %s77
      %s95 = sphi 0, %s95
      %s97 = sphi 0, %s95
      %s98 = sphi 0, %s97
      %s112 = sphi 0, %s98
      %s116 = sphi 0, %s116
      %s118 = sphi 0, %s116
      %s119 = sphi 0, %s118
      %s133 = sphi 0, %s119
      %s139 = sphi 0, %s141
      %s142 = sphi 0, %s139
      %s143 = sphi 0, %s142
      %s159 = sphi 0, %s143
    $region4: #{tpu_custom_call.1} parent=1 // loop_header_branch
      %22 = sbr.rel (%p20) target = $region8
    $region5: #{tpu_custom_call.1} parent=1 // loop_body
      %s24 = ssub.s32 %s19, 1
      %s25 = ssub.s32 %s19, 2
      %s26 = sadd.s32 %s19, 1
      %s27 = ssub.s32 %s19, %s26
      %p28 = scmp.eq.s32.totalorder %s27, 0
      %s30 = sadd.s32 %s29, 1
      %s31 = scalar_select %p28, %s29, %s30
      %p34 = pneg %p28
      %p35 = scmp.eq.s32.totalorder %s19, 1
      %p36 = por %p34, %p35
      %p37 = scmp.ne.s32.totalorder %s29, %s32
      %p38 = scmp.eq.s32.totalorder %s19, 0
      %p39 = por %p37, %p38
      %p40 = scmp.ne.s32.totalorder %s29, %s32
      %p41 = scmp.eq.s32.totalorder %s24, 1
      %p42 = por %p40, %p41
      %p43 = scmp.ne.s32.totalorder %s32, %s33
      %p44 = scmp.eq.s32.totalorder %s24, 0
      %p45 = por %p43, %p44
      %p46 = scmp.ne.s32.totalorder %s32, %s33
      %p47 = scmp.eq.s32.totalorder %s25, 1
      %p48 = por %p46, %p47
      %p50 = scmp.ne.s32.totalorder %s33, %s49
      %p51 = scmp.eq.s32.totalorder %s25, 0
      %p52 = por %p50, %p51
      %s54 = sadd.s32 %s53, 1
      %p57 = scmp.eq.s32.totalorder %s19, 1
      %p58 = scmp.ne.s32.totalorder %s53, %s55
      %p59 = scmp.eq.s32.totalorder %s19, 0
      %p60 = por %p58, %p59
      %p61 = scmp.ne.s32.totalorder %s53, %s55
      %p62 = scmp.eq.s32.totalorder %s24, 1
      %p63 = por %p61, %p62
      %p64 = scmp.ne.s32.totalorder %s55, %s56
      %p65 = scmp.eq.s32.totalorder %s24, 0
      %p66 = por %p64, %p65
      %p67 = scmp.ne.s32.totalorder %s55, %s56
      %p68 = scmp.eq.s32.totalorder %s25, 1
      %p69 = por %p67, %p68
      %p71 = scmp.ne.s32.totalorder %s56, %s70
      %p72 = scmp.eq.s32.totalorder %s25, 0
      %p73 = por %p71, %p72
      %s75 = sadd.s32 %s74, 1
      %p78 = scmp.eq.s32.totalorder %s19, 1
      %p79 = scmp.ne.s32.totalorder %s74, %s76
      %p80 = scmp.eq.s32.totalorder %s19, 0
      %p81 = por %p79, %p80
      %p82 = scmp.ne.s32.totalorder %s74, %s76
      %p83 = scmp.eq.s32.totalorder %s24, 1
      %p84 = por %p82, %p83
      %p85 = scmp.ne.s32.totalorder %s76, %s77
      %p86 = scmp.eq.s32.totalorder %s24, 0
      %p87 = por %p85, %p86
      %p88 = scmp.ne.s32.totalorder %s76, %s77
      %p89 = scmp.eq.s32.totalorder %s25, 1
      %p90 = por %p88, %p89
      %p92 = scmp.ne.s32.totalorder %s77, %s91
      %p93 = scmp.eq.s32.totalorder %s25, 0
      %p94 = por %p92, %p93
      %s96 = sadd.s32 %s95, 1
      %p99 = scmp.eq.s32.totalorder %s19, 1
      %p100 = scmp.ne.s32.totalorder %s95, %s97
      %p101 = scmp.eq.s32.totalorder %s19, 0
      %p102 = por %p100, %p101
      %p103 = scmp.ne.s32.totalorder %s95, %s97
      %p104 = scmp.eq.s32.totalorder %s24, 1
      %p105 = por %p103, %p104
      %p106 = scmp.ne.s32.totalorder %s97, %s98
      %p107 = scmp.eq.s32.totalorder %s24, 0
      %p108 = por %p106, %p107
      %p109 = scmp.ne.s32.totalorder %s97, %s98
      %p110 = scmp.eq.s32.totalorder %s25, 1
      %p111 = por %p109, %p110
      %p113 = scmp.ne.s32.totalorder %s98, %s112
      %p114 = scmp.eq.s32.totalorder %s25, 0
      %p115 = por %p113, %p114
      %s117 = sadd.s32 %s116, 1
      %p120 = scmp.eq.s32.totalorder %s19, 1
      %p121 = scmp.ne.s32.totalorder %s116, %s118
      %p122 = scmp.eq.s32.totalorder %s19, 0
      %p123 = por %p121, %p122
      %p124 = scmp.ne.s32.totalorder %s116, %s118
      %p125 = scmp.eq.s32.totalorder %s24, 1
      %p126 = por %p124, %p125
      %p127 = scmp.ne.s32.totalorder %s118, %s119
      %p128 = scmp.eq.s32.totalorder %s24, 0
      %p129 = por %p127, %p128
      %p130 = scmp.ne.s32.totalorder %s118, %s119
      %p131 = scmp.eq.s32.totalorder %s25, 1
      %p132 = por %p130, %p131
      %p134 = scmp.ne.s32.totalorder %s119, %s133
      %p135 = scmp.eq.s32.totalorder %s25, 0
      %p136 = por %p134, %p135
      %s137 = ssub.s32 %s19, %s26
      %p138 = scmp.eq.s32.totalorder %s137, 0
      %s140 = sadd.s32 %s139, 1
      %s141 = scalar_select %p138, %s139, %s140
      %p144 = pneg %p138
      %p145 = scmp.eq.s32.totalorder %s19, 1
      %p146 = por %p144, %p145
      %p147 = scmp.ne.s32.totalorder %s139, %s142
      %p148 = scmp.eq.s32.totalorder %s19, 0
      %p149 = por %p147, %p148
      %p150 = scmp.ne.s32.totalorder %s139, %s142
      %p151 = scmp.eq.s32.totalorder %s24, 1
      %p152 = por %p150, %p151
      %p153 = scmp.ne.s32.totalorder %s142, %s143
      %p154 = scmp.eq.s32.totalorder %s24, 0
      %p155 = por %p153, %p154
      %p156 = scmp.ne.s32.totalorder %s142, %s143
      %p157 = scmp.eq.s32.totalorder %s25, 1
      %p158 = por %p156, %p157
      %p160 = scmp.ne.s32.totalorder %s143, %s159
      %p161 = scmp.eq.s32.totalorder %s25, 0
      %p162 = por %p160, %p161
      %p163 = scmp.le.s32.totalorder 1, %s19
      %p164 = scmp.lt.s32.totalorder %s19, 3
      %p165 = pnand %p163, %p164
      %p166 = pneg %p165
      // Predicated region
      $region9: #{tpu_custom_call.1} parent=5 // pred_check
        _
      $region10: #{tpu_custom_call.1} parent=5 // pred_check_branch
        %168 = sbr.rel (%p165) target = $region12
      $region11: #{tpu_custom_call.1} parent=5 // pred_region
        %s169 = ssub.s32 %s19, 1
        // Predicated region
        $region13: #{tpu_custom_call.1} parent=11 // pred_check
          %p170 = pneg %p66
        $region14: #{tpu_custom_call.1} parent=11 // pred_check_branch
          %172 = sbr.rel (%p170) target = $region16
        $region15: #{tpu_custom_call.1} parent=11 // pred_region
          %s174 = ssub.s32 1024, 1024
          %175 = vsyncadd [#allocation6], %s174
          %s176 = sshll.u32 [#allocation5], 4
          %s177 = int_to_ptr.vmem [resolvable:$true] %s176
          %182 = dma.hbm_to_vmem [thread:$0]  %s1, 1024, %s177, [#allocation6], 64, 64, 4
        $region16: #{tpu_custom_call.1} parent=11 // pred_fallthru
          _
        // Predicated region
        $region17: #{tpu_custom_call.1} parent=11 // pred_check
          %p183 = pneg %p87
        $region18: #{tpu_custom_call.1} parent=11 // pred_check_branch
          %185 = sbr.rel (%p183) target = $region20
        $region19: #{tpu_custom_call.1} parent=11 // pred_region
          %s187 = ssub.s32 16, 16
          %188 = vsyncadd [#allocation6], %s187
          %s190 = sshll.u32 [#allocation7], 4
          %s191 = int_to_ptr.vmem [resolvable:$true] %s190
          %193 = dma.hbm_to_vmem [thread:$0]  %s2, 16, %s191, [#allocation6]
        $region20: #{tpu_custom_call.1} parent=11 // pred_fallthru
          _
        // Predicated region
        $region21: #{tpu_custom_call.1} parent=11 // pred_check
          %p194 = pneg %p108
        $region22: #{tpu_custom_call.1} parent=11 // pred_check_branch
          %196 = sbr.rel (%p194) target = $region24
        $region23: #{tpu_custom_call.1} parent=11 // pred_region
          %s198 = ssub.s32 36864, 36864
          %199 = vsyncadd [#allocation9], %s198
          %s200 = sshll.u32 [#allocation8], 4
          %s201 = int_to_ptr.vmem [resolvable:$true] %s200
          %206 = dma.hbm_to_vmem [thread:$0]  %s3, 36864, %s201, [#allocation9], 64, 64, 4
        $region24: #{tpu_custom_call.1} parent=11 // pred_fallthru
          _
        // Predicated region
        $region25: #{tpu_custom_call.1} parent=11 // pred_check
          %p207 = pneg %p129
        $region26: #{tpu_custom_call.1} parent=11 // pred_check_branch
          %209 = sbr.rel (%p207) target = $region28
        $region27: #{tpu_custom_call.1} parent=11 // pred_region
          %s211 = ssub.s32 16, 16
          %212 = vsyncadd [#allocation9], %s211
          %s214 = sshll.u32 [#allocation10], 4
          %s215 = int_to_ptr.vmem [resolvable:$true] %s214
          %217 = dma.hbm_to_vmem [thread:$0]  %s4, 16, %s215, [#allocation9]
        $region28: #{tpu_custom_call.1} parent=11 // pred_fallthru
          _
      $region12: #{tpu_custom_call.1} parent=5 // pred_fallthru
        _
      %p218 = scmp.lt.s32.totalorder %s19, 2
      // Predicated region
      $region29: #{tpu_custom_call.1} parent=5 // pred_check
        %p219 = pneg %p218
      $region30: #{tpu_custom_call.1} parent=5 // pred_check_branch
        %221 = sbr.rel (%p219) target = $region32
      $region31: #{tpu_custom_call.1} parent=5 // pred_region
        // Predicated region
        $region33: #{tpu_custom_call.1} parent=31 // pred_check
          %p222 = pneg %p39
        $region34: #{tpu_custom_call.1} parent=31 // pred_check_branch
          %224 = sbr.rel (%p222) target = $region36
        $region35: #{tpu_custom_call.1} parent=31 // pred_region
          %s225 = sand.u32 %s29, 1
          %s226 = scalar_lea.sflag [#allocation3], %s225
          %s227 = sand.u32 %s29, 1
          %s228 = smul.addr %s227, 144
          %s229 = scalar_lea.vmem [#allocation2], %s228
          %s231 = ssub.s32 2304, 2304
          %232 = vsyncadd %s226, %s231
          %s233 = smul.addr %s19, 64
          %s234 = scalar_lea.hbm %s0, %s233
          %s235 = sshll.u32 %s229, 4
          %s236 = int_to_ptr.vmem [resolvable:$true] %s235
          %241 = dma.hbm_to_vmem [thread:$0]  %s234, 2304, %s236, %s226, 128, 64, 4
        $region36: #{tpu_custom_call.1} parent=31 // pred_fallthru
          _
      $region32: #{tpu_custom_call.1} parent=5 // pred_fallthru
        _
      %p242 = scmp.le.s32.totalorder 1, %s19
      %p243 = scmp.lt.s32.totalorder %s19, 3
      %p244 = pnand %p242, %p243
      %p245 = pneg %p244
      // Predicated region
      $region37: #{tpu_custom_call.1} parent=5 // pred_check
        _
      $region38: #{tpu_custom_call.1} parent=5 // pred_check_branch
        %247 = sbr.rel (%p244) target = $region40
      $region39: #{tpu_custom_call.1} parent=5 // pred_region
        %s248 = ssub.s32 %s19, 1
        %s249 = sand.u32 %s32, 1
        %s250 = scalar_lea.sflag [#allocation3], %s249
        %s251 = sand.u32 %s32, 1
        %s252 = smul.addr %s251, 144
        %s253 = scalar_lea.vmem [#allocation2], %s252
        // Predicated region
        $region41: #{tpu_custom_call.1} parent=39 // pred_check
          %p254 = pneg %p45
        $region42: #{tpu_custom_call.1} parent=39 // pred_check_branch
          %256 = sbr.rel (%p254) target = $region44
        $region43: #{tpu_custom_call.1} parent=39 // pred_region
          %257 = dma.done %s250, 2304
        $region44: #{tpu_custom_call.1} parent=39 // pred_fallthru
          _
        // Predicated region
        $region45: #{tpu_custom_call.1} parent=39 // pred_check
          %p258 = pneg %p66
        $region46: #{tpu_custom_call.1} parent=39 // pred_check_branch
          %260 = sbr.rel (%p258) target = $region48
        $region47: #{tpu_custom_call.1} parent=39 // pred_region
          %261 = dma.done [#allocation6], 1024
        $region48: #{tpu_custom_call.1} parent=39 // pred_fallthru
          _
        // Predicated region
        $region49: #{tpu_custom_call.1} parent=39 // pred_check
          %p262 = pneg %p87
        $region50: #{tpu_custom_call.1} parent=39 // pred_check_branch
          %264 = sbr.rel (%p262) target = $region52
        $region51: #{tpu_custom_call.1} parent=39 // pred_region
          %265 = dma.done [#allocation6], 16
        $region52: #{tpu_custom_call.1} parent=39 // pred_fallthru
          _
        // Predicated region
        $region53: #{tpu_custom_call.1} parent=39 // pred_check
          %p266 = pneg %p108
        $region54: #{tpu_custom_call.1} parent=39 // pred_check_branch
          %268 = sbr.rel (%p266) target = $region56
        $region55: #{tpu_custom_call.1} parent=39 // pred_region
          %269 = dma.done [#allocation9], 36864
        $region56: #{tpu_custom_call.1} parent=39 // pred_fallthru
          _
        // Predicated region
        $region57: #{tpu_custom_call.1} parent=39 // pred_check
          %p270 = pneg %p129
        $region58: #{tpu_custom_call.1} parent=39 // pred_check_branch
          %272 = sbr.rel (%p270) target = $region60
        $region59: #{tpu_custom_call.1} parent=39 // pred_region
          %273 = dma.done [#allocation9], 16
        $region60: #{tpu_custom_call.1} parent=39 // pred_fallthru
          _
        %s274 = sand.u32 %s32, 1
        %s275 = scalar_lea.sflag [#allocation3], %s274
        %s276 = sand.u32 %s32, 1
        %s277 = smul.addr %s276, 144
        %s278 = scalar_lea.vmem [#allocation2], %s277
        %p279 = pneg %p45
        %p280 = pneg %p42
        %p281 = pneg %p66
        %p282 = pneg %p63
        %p283 = pneg %p87
        %p284 = pneg %p84
        %p285 = pneg %p108
        %p286 = pneg %p105
        %p287 = pneg %p129
        %p288 = pneg %p126
        %p289 = pneg %p155
        %p290 = pneg %p152
        %s291 = sand.u32 %s142, 1
        %s292 = scalar_lea.sflag [#allocation4], %s291
        %s293 = sand.u32 %s142, 1
        %s294 = smul.addr %s293, 8
        %s295 = scalar_lea.vmem [#allocation11], %s294
        %v297 = vld [vmem:[#allocation5] sm:$0xf]
        %v298 = vld [vmem:[#allocation5 + $0x4] sm:$0xf]
        %v299 = vld [vmem:[#allocation5 + $0x8] sm:$0xf]
        %v300 = vld [vmem:[#allocation5 + $0xc] sm:$0xf]
        %v301 = vld [vmem:[#allocation5 + $0x10] sm:$0xf]
        %v302 = vld [vmem:[#allocation5 + $0x14] sm:$0xf]
        %v303 = vld [vmem:[#allocation5 + $0x18] sm:$0xf]
        %v304 = vld [vmem:[#allocation5 + $0x1c] sm:$0xf]
        %v305 = vld [vmem:[#allocation5 + $0x20] sm:$0xf]
        %v306 = vld [vmem:[#allocation5 + $0x24] sm:$0xf]
        %v307 = vld [vmem:[#allocation5 + $0x28] sm:$0xf]
        %v308 = vld [vmem:[#allocation5 + $0x2c] sm:$0xf]
        %v309 = vld [vmem:[#allocation5 + $0x30] sm:$0xf]
        %v310 = vld [vmem:[#allocation5 + $0x34] sm:$0xf]
        %v311 = vld [vmem:[#allocation5 + $0x38] sm:$0xf]
        %v312 = vld [vmem:[#allocation5 + $0x3c] sm:$0xf]
        %v313 = vld [vmem:[#allocation7] sm:$0x1]
        %314 = vst [vmem:[%s295] sm:$0xff] 0.0
        loop: start=0, step=1, limit=36
        $region61: #{tpu_custom_call.1} parent=39 // loop_pre_header
          _
        $region62: #{tpu_custom_call.1} parent=39 // loop_header
          %s316 = sphi 0, %s320
          %p317 = scmp.ge.s32.totalorder %s316, 36
        $region63: #{tpu_custom_call.1} parent=39 // loop_header_branch
          %319 = sbr.rel (%p317) target = $region67
        $region64: #{tpu_custom_call.1} parent=39 // loop_body
          %s321 = smul.addr %s316, 4
          %s322 = scalar_lea.vmem %s253, %s321 [#allocation2]
          %v323 = vld [vmem:[%s322] sm:$0xf]
          %v325 = vlaneseq
          %v326 = vshrl.u32 %v325, 7
          %v327 = vsub.s32 0, %v326
          %v328 = vrot.slane %v313, %v327
          %v346 = vunpack.c.l.b16 %v297
          %v347 = vunpack.c.l.b16 %v298
          %v348 = vunpack.c.l.b16 %v299
          %v349 = vunpack.c.l.b16 %v300
          %v350 = vunpack.c.l.b16 %v301
          %v351 = vunpack.c.l.b16 %v302
          %v352 = vunpack.c.l.b16 %v303
          %v353 = vunpack.c.l.b16 %v304
          %v354 = vunpack.c.l.b16 %v305
          %v355 = vunpack.c.l.b16 %v306
          %v356 = vunpack.c.l.b16 %v307
          %v357 = vunpack.c.l.b16 %v308
          %v358 = vunpack.c.l.b16 %v309
          %v359 = vunpack.c.l.b16 %v310
          %v360 = vunpack.c.l.b16 %v311
          %v361 = vunpack.c.l.b16 %v312
          %v362 = vpack.c.b16 %v347, %v346
          %v363 = vpack.c.b16 %v349, %v348
          %v364 = vpack.c.b16 %v351, %v350
          %v365 = vpack.c.b16 %v353, %v352
          %v366 = vpack.c.b16 %v355, %v354
          %v367 = vpack.c.b16 %v357, %v356
          %v368 = vpack.c.b16 %v359, %v358
          %v369 = vpack.c.b16 %v361, %v360
          %378 = vmatprep.subr.bf16.mxu0 0
          %379 = vmatpush1.bf16.msra.mxu0 %v362
          %380 = vmatprep.subr.bf16.mxu0 0
          %381 = vmatpush1.bf16.msra.mxu0 %v363
          %382 = vmatprep.subr.bf16.mxu0 0
          %383 = vmatpush1.bf16.msra.mxu0 %v364
          %384 = vmatprep.subr.bf16.mxu0 0
          %385 = vmatpush1.bf16.msra.mxu0 %v365
          %386 = vmatprep.subr.bf16.mxu0 0
          %387 = vmatpush1.bf16.msra.mxu0 %v366
          %388 = vmatprep.subr.bf16.mxu0 0
          %389 = vmatpush1.bf16.msra.mxu0 %v367
          %390 = vmatprep.subr.bf16.mxu0 0
          %391 = vmatpush1.bf16.msra.mxu0 %v368
          %392 = vmatprep.subr.bf16.mxu0 0
          %393 = vmatpush1.bf16.msra.mxu0 %v369
          %394 = vmatprep.subr.bf16.mxu0 0
          %395 = vmatpush1.bf16.msra.mxu0 0
          %396 = vmatprep.subr.bf16.mxu0 0
          %397 = vmatpush1.bf16.msra.mxu0 0
          %398 = vmatprep.subr.bf16.mxu0 0
          %399 = vmatpush1.bf16.msra.mxu0 0
          %400 = vmatprep.subr.bf16.mxu0 0
          %401 = vmatpush1.bf16.msra.mxu0 0
          %402 = vmatprep.subr.bf16.mxu0 0
          %403 = vmatpush1.bf16.msra.mxu0 0
          %404 = vmatprep.subr.bf16.mxu0 0
          %405 = vmatpush1.bf16.msra.mxu0 0
          %406 = vmatprep.subr.bf16.mxu0 0
          %407 = vmatpush1.bf16.msra.mxu0 0
          %408 = vmatprep.subr.bf16.mxu0 0
          %409 = vmatpush1.bf16.msra.mxu0 0
          %410 = vmatprep.mubr.bf16.mxu0 0
          %411 = vmatmul.mubr.bf16.gmra.mrb[0].mxu0 %v323
          %v412 = vpop.f32.mrb[0].mxu0
          %v413 = vadd.f32 %v328, %v412
          %v414 = vpop.f32.mrb[0].mxu0
          %v415 = vpop.f32.mrb[0].mxu0
          %v416 = vpop.f32.mrb[0].mxu0
          %417 = vdwg.mxu0
          %v418 = vmax.f32 %v413, 0.0
          %v419 = vld [vmem:[%s295] sm:$0xff]
          %v420 = vpack.c.bf16 %v418, %v418
          %s421 = smul.u32 %s316, 16
          %s422 = smul.addr %s421, 4
          %s423 = scalar_lea.vmem [#allocation8], %s422
          %v424 = vld [vmem:[%s423] sm:$0xf]
          %v425 = vld [vmem:[%s423 + $0x4] sm:$0xf]
          %v426 = vld [vmem:[%s423 + $0x8] sm:$0xf]
          %v427 = vld [vmem:[%s423 + $0xc] sm:$0xf]
          %v428 = vld [vmem:[%s423 + $0x10] sm:$0xf]
          %v429 = vld [vmem:[%s423 + $0x14] sm:$0xf]
          %v430 = vld [vmem:[%s423 + $0x18] sm:$0xf]
          %v431 = vld [vmem:[%s423 + $0x1c] sm:$0xf]
          %v432 = vld [vmem:[%s423 + $0x20] sm:$0xf]
          %v433 = vld [vmem:[%s423 + $0x24] sm:$0xf]
          %v434 = vld [vmem:[%s423 + $0x28] sm:$0xf]
          %v435 = vld [vmem:[%s423 + $0x2c] sm:$0xf]
          %v436 = vld [vmem:[%s423 + $0x30] sm:$0xf]
          %v437 = vld [vmem:[%s423 + $0x34] sm:$0xf]
          %v438 = vld [vmem:[%s423 + $0x38] sm:$0xf]
          %v439 = vld [vmem:[%s423 + $0x3c] sm:$0xf]
          %v456 = vunpack.c.l.b16 %v424
          %v457 = vunpack.c.l.b16 %v425
          %v458 = vunpack.c.l.b16 %v426
          %v459 = vunpack.c.l.b16 %v427
          %v460 = vunpack.c.l.b16 %v428
          %v461 = vunpack.c.l.b16 %v429
          %v462 = vunpack.c.l.b16 %v430
          %v463 = vunpack.c.l.b16 %v431
          %v464 = vunpack.c.l.b16 %v432
          %v465 = vunpack.c.l.b16 %v433
          %v466 = vunpack.c.l.b16 %v434
          %v467 = vunpack.c.l.b16 %v435
          %v468 = vunpack.c.l.b16 %v436
          %v469 = vunpack.c.l.b16 %v437
          %v470 = vunpack.c.l.b16 %v438
          %v471 = vunpack.c.l.b16 %v439
          %v472 = vpack.c.b16 %v457, %v456
          %v473 = vpack.c.b16 %v459, %v458
          %v474 = vpack.c.b16 %v461, %v460
          %v475 = vpack.c.b16 %v463, %v462
          %v476 = vpack.c.b16 %v465, %v464
          %v477 = vpack.c.b16 %v467, %v466
          %v478 = vpack.c.b16 %v469, %v468
          %v479 = vpack.c.b16 %v471, %v470
          %488 = vmatprep.subr.bf16.mxu0 0
          %489 = vmatpush1.bf16.msra.mxu0 %v472
          %490 = vmatprep.subr.bf16.mxu0 0
          %491 = vmatpush1.bf16.msra.mxu0 %v473
          %492 = vmatprep.subr.bf16.mxu0 0
          %493 = vmatpush1.bf16.msra.mxu0 %v474
          %494 = vmatprep.subr.bf16.mxu0 0
          %495 = vmatpush1.bf16.msra.mxu0 %v475
          %496 = vmatprep.subr.bf16.mxu0 0
          %497 = vmatpush1.bf16.msra.mxu0 %v476
          %498 = vmatprep.subr.bf16.mxu0 0
          %499 = vmatpush1.bf16.msra.mxu0 %v477
          %500 = vmatprep.subr.bf16.mxu0 0
          %501 = vmatpush1.bf16.msra.mxu0 %v478
          %502 = vmatprep.subr.bf16.mxu0 0
          %503 = vmatpush1.bf16.msra.mxu0 %v479
          %504 = vmatprep.subr.bf16.mxu0 0
          %505 = vmatpush1.bf16.msra.mxu0 0
          %506 = vmatprep.subr.bf16.mxu0 0
          %507 = vmatpush1.bf16.msra.mxu0 0
          %508 = vmatprep.subr.bf16.mxu0 0
          %509 = vmatpush1.bf16.msra.mxu0 0
          %510 = vmatprep.subr.bf16.mxu0 0
          %511 = vmatpush1.bf16.msra.mxu0 0
          %512 = vmatprep.subr.bf16.mxu0 0
          %513 = vmatpush1.bf16.msra.mxu0 0
          %514 = vmatprep.subr.bf16.mxu0 0
          %515 = vmatpush1.bf16.msra.mxu0 0
          %516 = vmatprep.subr.bf16.mxu0 0
          %517 = vmatpush1.bf16.msra.mxu0 0
          %518 = vmatprep.subr.bf16.mxu0 0
          %519 = vmatpush1.bf16.msra.mxu0 0
          %520 = vmatprep.mubr.bf16.mxu0 0
          %521 = vmatmul.mubr.bf16.gmra.mrb[0].mxu0 %v420
          %v522 = vpop.f32.mrb[0].mxu0
          %v523 = vadd.f32 0.0, %v522
          %v524 = vpop.f32.mrb[0].mxu0
          %v525 = vpop.f32.mrb[0].mxu0
          %v526 = vpop.f32.mrb[0].mxu0
          %527 = vdwg.mxu0
          %v528 = vadd.f32 %v419, %v523
          %529 = vst [vmem:[%s295] sm:$0xff] %v528
        $region65: #{tpu_custom_call.1} parent=39 // loop_footer
          %s320 = sadd.s32 1, %s316
        $region66: #{tpu_custom_call.1} parent=39 // loop_footer_branch
          %315 = sbr.rel target = $region62
        $region67: #{tpu_custom_call.1} parent=39 // loop_exit
          _
        %v530 = vld [vmem:[%s295] sm:$0xff]
        %v531 = vld [vmem:[#allocation10] sm:$0x1]
        %v533 = vlaneseq
        %v534 = vshrl.u32 %v533, 7
        %v535 = vsub.s32 0, %v534
        %v536 = vrot.slane %v531, %v535
        %v538 = vadd.f32 %v530, %v536
        %v539 = vmax.f32 %v538, 0.0
        %540 = vst [vmem:[%s295] sm:$0xff] %v539
        %s541 = sand.u32 %s142, 1
        %s542 = scalar_lea.sflag [#allocation4], %s541
        %s543 = sand.u32 %s142, 1
        %s544 = smul.addr %s543, 8
        %s545 = scalar_lea.vmem [#allocation11], %s544
        // Predicated region
        $region68: #{tpu_custom_call.1} parent=39 // pred_check
          %p546 = pneg %p152
        $region69: #{tpu_custom_call.1} parent=39 // pred_check_branch
          %548 = sbr.rel (%p546) target = $region71
        $region70: #{tpu_custom_call.1} parent=39 // pred_region
          %s550 = ssub.s32 128, 128
          %551 = vsyncadd %s542, %s550
          %s552 = smul.addr %s24, 128
          %s553 = scalar_lea.hbm %s5, %s552
          %s555 = sshll.u32 %s545, 4
          %s556 = int_to_ptr.vmem [resolvable:$true] %s555
          %558 = dma.vmem_to_hbm [thread:$0]  %s556, 128, %s553, %s542
        $region71: #{tpu_custom_call.1} parent=39 // pred_fallthru
          _
      $region40: #{tpu_custom_call.1} parent=5 // pred_fallthru
        _
      %p559 = scmp.le.s32.totalorder 2, %s19
      // Predicated region
      $region72: #{tpu_custom_call.1} parent=5 // pred_check
        %p560 = pneg %p559
      $region73: #{tpu_custom_call.1} parent=5 // pred_check_branch
        %562 = sbr.rel (%p560) target = $region75
      $region74: #{tpu_custom_call.1} parent=5 // pred_region
        %s563 = ssub.s32 %s19, 2
        // Predicated region
        $region76: #{tpu_custom_call.1} parent=74 // pred_check
          %p564 = pneg %p158
        $region77: #{tpu_custom_call.1} parent=74 // pred_check_branch
          %566 = sbr.rel (%p564) target = $region79
        $region78: #{tpu_custom_call.1} parent=74 // pred_region
          %s567 = sand.u32 %s143, 1
          %s568 = scalar_lea.sflag [#allocation4], %s567
          %s569 = sand.u32 %s143, 1
          %s570 = smul.addr %s569, 8
          %s571 = scalar_lea.vmem [#allocation11], %s570
          %572 = dma.done %s568, 128
        $region79: #{tpu_custom_call.1} parent=74 // pred_fallthru
          _
      $region75: #{tpu_custom_call.1} parent=5 // pred_fallthru
        _
    $region6: #{tpu_custom_call.1} parent=1 // loop_footer
      %s23 = sadd.s32 1, %s19
    $region7: #{tpu_custom_call.1} parent=1 // loop_footer_branch
      %18 = sbr.rel target = $region3
    $region8: #{tpu_custom_call.1} parent=1 // loop_exit
      _
    %573 = vsyncpa [#allocation3], 1
    %s574 = scalar_lea.sflag [#allocation3], 1
    %575 = vsyncpa %s574, 1
    %576 = vsyncpa [#allocation6], 1
    %577 = vsyncpa [#allocation9], 1
    %578 = vsyncpa [#allocation4], 1
    %s579 = scalar_lea.sflag [#allocation4], 1
    %580 = vsyncpa %s579, 1

</llo_original>
